<compile_context>
chip_gen: v7x
topology: tpu7x:2x2x1
jax: 0.10.0
libtpu: 0.0.40
codegen_flags: <defaults>
</compile_context>

<pallas_src>
from functools import partial

import jax
import jax.numpy as jnp
from jax.experimental import pallas as pl
from jax.experimental.pallas import tpu as pltpu


# ----------------------------- LayerNorm kernel -----------------------------

def _layernorm_kernel(x_ref, g_ref, b_ref, o_ref, *, eps):
    x = x_ref[...].astype(jnp.float32)                       # (rows_tile, D)
    mean = jnp.mean(x, axis=-1, keepdims=True)
    var = jnp.mean(jnp.square(x - mean), axis=-1, keepdims=True)
    y = (x - mean) * jax.lax.rsqrt(var + eps)
    o_ref[...] = (y * g_ref[...] + b_ref[...]).astype(o_ref.dtype)


def layernorm(x, gamma, beta, eps=1e-5):
    B, N, D = x.shape
    rows = B * N
    x2 = x.reshape(rows, D)

    # largest row tile (multiple of 8, <= 1024) that divides rows, else full.
    row_tile = rows
    for cand in (1024, 512, 256, 128, 64, 32, 16, 8):
        if rows % cand == 0:
            row_tile = cand
            break

    out = pl.pallas_call(
        partial(_layernorm_kernel, eps=eps),
        out_shape=jax.ShapeDtypeStruct((rows, D), x.dtype),
        grid=(rows // row_tile,),
        in_specs=[
            pl.BlockSpec((row_tile, D), lambda i: (i, 0)),
            pl.BlockSpec((1, D), lambda i: (0, 0)),
            pl.BlockSpec((1, D), lambda i: (0, 0)),
        ],
        out_specs=pl.BlockSpec((row_tile, D), lambda i: (i, 0)),
        compiler_params=pltpu.CompilerParams(dimension_semantics=("parallel",)),
    )(x2, gamma.reshape(1, D), beta.reshape(1, D))
    return out.reshape(B, N, D)


# ------------------- Relation-aware attention core kernel -------------------

def _attn_dist_kernel(*refs, heads, k_buckets, scale, has_bias):
    if has_bias:
        q_ref, k_ref, v_ref, idx_ref, ek_ref, ev_ref, bias_ref, o_ref = refs
    else:
        q_ref, k_ref, v_ref, idx_ref, ek_ref, ev_ref, o_ref = refs
        bias_ref = None

    q = q_ref[0]                                   # (N, D)
    k = k_ref[0]                                   # (N, D)
    v = v_ref[0]                                   # (N, D)
    idx = idx_ref[0]                               # (N, N) int32 bucket map
    emb_k = ek_ref[...].astype(jnp.bfloat16)       # (K, Dh)
    emb_v = ev_ref[...].astype(jnp.bfloat16)       # (K, Dh)

    N, D = q.shape
    Dh = D // heads

    q_bf = q.astype(jnp.bfloat16)
    k_bf = k.astype(jnp.bfloat16)
    v_bf = v.astype(jnp.bfloat16)

    bias = bias_ref[0].astype(jnp.float32) if has_bias else None

    head_outs = []
    for h in range(heads):
        lo, hi = h * Dh, (h + 1) * Dh
        qh = q_bf[:, lo:hi]                        # (N, Dh) bf16
        kh = k_bf[:, lo:hi]
        vh = v_bf[:, lo:hi]

        # content scores (MXU, f32 accumulate)
        s = jnp.dot(qh, kh.T, preferred_element_type=jnp.float32)       # (N, N)

        # relation scores via bucket factorization:
        #   s_rel[i, j] = (q_i . emb_k[idx[i, j]]) = qe[i, idx[i, j]]
        qe = jnp.dot(qh, emb_k.T, preferred_element_type=jnp.float32)   # (N, K)
        s_rel = jnp.zeros_like(s)
        for c in range(k_buckets):
            s_rel = jnp.where(idx == c, qe[:, c:c + 1], s_rel)
        s = (s + s_rel) * scale
        if has_bias:
            s = s + bias

        # softmax over keys (divide -> EUP reciprocal)
        s = s - jnp.max(s, axis=-1, keepdims=True)
        p = jnp.exp(s)
        p = p * pl.reciprocal(jnp.sum(p, axis=-1, keepdims=True), approx=True)
        p_bf = p.astype(jnp.bfloat16)

        # content output (MXU)
        out_h = jnp.dot(p_bf, vh, preferred_element_type=jnp.float32)   # (N, Dh)

        # relation output: P_bucket[i, c] = sum_j p[i, j] * [idx[i, j] == c]
        cols = [jnp.sum(jnp.where(idx == c, p, 0.0), axis=-1, keepdims=True)
                for c in range(k_buckets)]
        p_bucket = jnp.concatenate(cols, axis=-1).astype(jnp.bfloat16)  # (N, K)
        out_h = out_h + jnp.dot(p_bucket, emb_v,
                                preferred_element_type=jnp.float32)     # (N, Dh)
        head_outs.append(out_h)

    # lane-dense single store of all heads: (N, H*Dh) = (N, D)
    o_ref[0] = jnp.concatenate(head_outs, axis=-1).astype(o_ref.dtype)


def rel_attention(q, k, v, idx, emb_k, emb_v, bias, *, heads, k_buckets):
    B, N, D = q.shape
    Dh = D // heads
    K = emb_k.shape[0]
    scale = 1.0 / float(Dh) ** 0.5
    has_bias = bias is not None

    in_specs = [
        pl.BlockSpec((1, N, D), lambda b: (b, 0, 0)),      # q
        pl.BlockSpec((1, N, D), lambda b: (b, 0, 0)),      # k
        pl.BlockSpec((1, N, D), lambda b: (b, 0, 0)),      # v
        pl.BlockSpec((1, N, N), lambda b: (b, 0, 0)),      # bucket idx
        pl.BlockSpec((K, Dh), lambda b: (0, 0)),           # emb_k (shared)
        pl.BlockSpec((K, Dh), lambda b: (0, 0)),           # emb_v (shared)
    ]
    inputs = [q, k, v, idx, emb_k, emb_v]
    if has_bias:
        in_specs.append(pl.BlockSpec((1, N, N), lambda b: (b, 0, 0)))  # per-batch bias
        inputs.append(bias)

    # size scoped VMEM to the double-buffered blocks, with headroom.
    blk_bytes = 4 * (4 * N * D + N * N * (2 if has_bias else 1) + 2 * K * Dh)
    vmem_limit = int(min(64 << 20, max(2 * blk_bytes + (8 << 20), 16 << 20)))

    return pl.pallas_call(
        partial(_attn_dist_kernel, heads=heads, k_buckets=k_buckets,
                scale=scale, has_bias=has_bias),
        out_shape=jax.ShapeDtypeStruct((B, N, D), q.dtype),
        grid=(B,),
        in_specs=in_specs,
        out_specs=pl.BlockSpec((1, N, D), lambda b: (b, 0, 0)),
        compiler_params=pltpu.CompilerParams(
            dimension_semantics=("parallel",),
            vmem_limit_bytes=vmem_limit,
        ),
    )(*inputs)


# ------------------------------ Parameter init ------------------------------

def init_params(key, dim, heads, k):
    dh = dim // heads
    ks = jax.random.split(key, 12)

    def linear(kk, fan_in, fan_out):
        lim = 1.0 / float(fan_in) ** 0.5
        kw, kb = jax.random.split(kk)
        w = jax.random.uniform(kw, (fan_in, fan_out), jnp.float32, -lim, lim)
        b = jax.random.uniform(kb, (fan_out,), jnp.float32, -lim, lim)
        return w, b

    wq, bq = linear(ks[0], dim, dim)
    wk, bk = linear(ks[1], dim, dim)
    wv, bv = linear(ks[2], dim, dim)
    wo, bo = linear(ks[3], dim, dim)
    return {
        "ln_g": jnp.ones((dim,), jnp.float32),
        "ln_b": jnp.zeros((dim,), jnp.float32),
        "wq": wq, "bq": bq, "wk": wk, "bk": bk, "wv": wv, "bv": bv,
        "wo": wo, "bo": bo,
        # distance-bucket relation embeddings (nn.Embedding default ~ N(0,1))
        "emb_k": jax.random.normal(ks[4], (k, dh), jnp.float32),
        "emb_v": jax.random.normal(ks[5], (k, dh), jnp.float32),
    }


# ------------------------------- Forward pass --------------------------------

def attention_dist_forward(params, x, coord, mask=None, heads=8, k=10):
    B, N, D = x.shape

    # LayerNorm (Pallas kernel, row-tiled)
    xn = layernorm(x, params["ln_g"], params["ln_b"])

    # q/k/v projections (glue matmuls) -- heads are NOT split in HBM.
    q = xn @ params["wq"] + params["bq"]
    kk = xn @ params["wk"] + params["bk"]
    v = xn @ params["wv"] + params["bv"]

    # pairwise distances -> bucket indices (small (B, N, N) int32 only)
    diff = coord[:, :, None, :] - coord[:, None, :, :]
    dist = jnp.sqrt(jnp.sum(diff * diff, axis=-1) + 1e-12)        # (B, N, N)
    idx = jnp.clip(jnp.floor(dist), 0, k - 1).astype(jnp.int32)   # (B, N, N)

    # per-batch additive bias only when a mask is given (heads share it)
    bias = None
    if mask is not None:
        bias = jnp.where(mask != 0, 0.0, -1e9).astype(jnp.float32)  # (B, N, N)

    # relation-aware attention (Pallas kernel, grid over batch; all heads per step)
    o = rel_attention(q, kk, v, idx, params["emb_k"], params["emb_v"], bias,
                      heads=heads, k_buckets=k)                    # (B, N, D)

    # output projection (glue)
    return o @ params["wo"] + params["bo"]


# ----------------------------------- Main ------------------------------------

if __name__ == "__main__":
    B, N, D, H, K = 2, 8, 32, 8, 10
    key = jax.random.PRNGKey(0)
    k_x, k_c, k_m, k_p = jax.random.split(key, 4)

    x = jax.random.normal(k_x, (B, N, D), jnp.float32)
    coord = jax.random.uniform(k_c, (B, N, 3), jnp.float32) * 6.0  # spread over buckets
    params = init_params(k_p, D, H, K)

    # no-mask path (no bias tensor built or DMA'd)
    out = attention_dist_forward(params, x, coord, mask=None, heads=H, k=K)
    out = jax.block_until_ready(out)
    assert out.shape == (B, N, D)
    assert bool(jnp.all(jnp.isfinite(out)))

    # masked path (per-batch bias, shared across heads)
    mask = (jax.random.uniform(k_m, (B, N, N)) > 0.3).astype(jnp.float32)
    mask = jnp.maximum(mask, jnp.eye(N, dtype=jnp.float32)[None])  # no fully-masked rows
    out_m = attention_dist_forward(params, x, coord, mask=mask, heads=H, k=K)
    out_m = jax.block_until_ready(out_m)
    assert out_m.shape == (B, N, D)
    assert bool(jnp.all(jnp.isfinite(out_m)))

    print("KERNEL_OK")
</pallas_src>

<mosaic_0001>
module attributes {stable_mosaic.version = 11 : i64} {
  func.func @_layernorm_kernel(%arg0: i32, %arg1: memref<16x32xf32, #tpu.memory_space<vmem>>, %arg2: memref<1x32xf32, #tpu.memory_space<vmem>>, %arg3: memref<1x32xf32, #tpu.memory_space<vmem>>, %arg4: memref<16x32xf32, #tpu.memory_space<vmem>>) attributes {dimension_semantics = [#tpu.dimension_semantics<parallel>], iteration_bounds = array<i64: 1>, scalar_prefetch = 0 : i64, scratch_operands = 0 : i64, tpu.core_type = #tpu.core_type<tc>, window_params = [{transform_indices = @transform_0, window_bounds = array<i64: 16, 32>}, {pipeline_mode = #tpu.pipeline_mode<synchronous>, transform_indices = @transform_1, window_bounds = array<i64: 1, 32>}, {pipeline_mode = #tpu.pipeline_mode<synchronous>, transform_indices = @transform_2, window_bounds = array<i64: 1, 32>}, {transform_indices = @transform_3, window_bounds = array<i64: 16, 32>}]} {
    %c0 = arith.constant 0 : index
    %c0_0 = arith.constant 0 : index
    %0 = vector.load %arg1[%c0, %c0_0] : memref<16x32xf32, #tpu.memory_space<vmem>>, vector<16x32xf32>
    %cst = arith.constant dense<0.000000e+00> : vector<16xf32>
    %1 = vector.multi_reduction <add>, %0, %cst [1] : vector<16x32xf32> to vector<16xf32>
    %2 = vector.shape_cast %1 : vector<16xf32> to vector<16x1xf32>
    %cst_1 = arith.constant 3.200000e+01 : f32
    %3 = vector.broadcast %cst_1 : f32 to vector<16x1xf32>
    %4 = arith.divf %2, %3 : vector<16x1xf32>
    %5 = vector.broadcast %4 : vector<16x1xf32> to vector<16x32xf32>
    %6 = arith.subf %0, %5 : vector<16x32xf32>
    %7 = arith.mulf %6, %6 : vector<16x32xf32>
    %cst_2 = arith.constant dense<0.000000e+00> : vector<16xf32>
    %8 = vector.multi_reduction <add>, %7, %cst_2 [1] : vector<16x32xf32> to vector<16xf32>
    %9 = vector.shape_cast %8 : vector<16xf32> to vector<16x1xf32>
    %cst_3 = arith.constant 3.200000e+01 : f32
    %10 = vector.broadcast %cst_3 : f32 to vector<16x1xf32>
    %11 = arith.divf %9, %10 : vector<16x1xf32>
    %12 = vector.broadcast %4 : vector<16x1xf32> to vector<16x32xf32>
    %13 = arith.subf %0, %12 : vector<16x32xf32>
    %cst_4 = arith.constant 9.99999974E-6 : f32
    %14 = vector.broadcast %cst_4 : f32 to vector<16x1xf32>
    %15 = arith.addf %11, %14 : vector<16x1xf32>
    %16 = math.rsqrt %15 : vector<16x1xf32>
    %17 = vector.broadcast %16 : vector<16x1xf32> to vector<16x32xf32>
    %18 = arith.mulf %13, %17 : vector<16x32xf32>
    %c0_5 = arith.constant 0 : index
    %c0_6 = arith.constant 0 : index
    %19 = vector.load %arg2[%c0_5, %c0_6] : memref<1x32xf32, #tpu.memory_space<vmem>>, vector<1x32xf32>
    %20 = vector.broadcast %19 : vector<1x32xf32> to vector<16x32xf32>
    %21 = arith.mulf %18, %20 : vector<16x32xf32>
    %c0_7 = arith.constant 0 : index
    %c0_8 = arith.constant 0 : index
    %22 = vector.load %arg3[%c0_7, %c0_8] : memref<1x32xf32, #tpu.memory_space<vmem>>, vector<1x32xf32>
    %23 = vector.broadcast %22 : vector<1x32xf32> to vector<16x32xf32>
    %24 = arith.addf %21, %23 : vector<16x32xf32>
    %c0_9 = arith.constant 0 : index
    %c0_10 = arith.constant 0 : index
    %25 = vector.load %arg4[%c0_9, %c0_10] : memref<16x32xf32, #tpu.memory_space<vmem>>, vector<16x32xf32>
    tpu.vector_store %arg4[%c0_9, %c0_10], %24 {strides = array<i32>} : memref<16x32xf32, #tpu.memory_space<vmem>>, vector<16x32xf32>,
    return
  }
  func.func @transform_0(%arg0: i32) -> (i32, i32) {
    %c0_i32 = arith.constant 0 : i32
    %c0_i32_0 = arith.constant 0 : i32
    return %arg0, %c0_i32 : i32, i32
  }
  func.func @transform_1(%arg0: i32) -> (i32, i32) {
    %c0_i32 = arith.constant 0 : i32
    %c0_i32_0 = arith.constant 0 : i32
    %c0_i32_1 = arith.constant 0 : i32
    return %c0_i32, %c0_i32_0 : i32, i32
  }
  func.func @transform_2(%arg0: i32) -> (i32, i32) {
    %c0_i32 = arith.constant 0 : i32
    %c0_i32_0 = arith.constant 0 : i32
    %c0_i32_1 = arith.constant 0 : i32
    return %c0_i32, %c0_i32_0 : i32, i32
  }
  func.func @transform_3(%arg0: i32) -> (i32, i32) {
    %c0_i32 = arith.constant 0 : i32
    %c0_i32_0 = arith.constant 0 : i32
    return %arg0, %c0_i32 : i32, i32
  }
}

</mosaic_0001>

<llo_original>
// kernel: tpu_custom_call.1
$region0: #{tpu_custom_call.1}
  #allocation0 [shape = 'u32[]', space=smem, size = 0x4, offset = 0x4, fixed_abs, tag = 'smem constant byte address 0x4 - core index']
  #allocation1 [shape = 'u32[144,128]{1,0:T(1,128)}', space=vmem, size = 0x12000, scoped, tag = 'internal scratch']
  %s0 = inlined_call_operand.hbm [shape: f32[16,32], index: 0, kind: input, shape index: {}]
  %s1 = inlined_call_operand.vmem [shape: f32[1,32], index: 1, kind: input, shape index: {}]
  %s2 = inlined_call_operand.vmem [shape: f32[1,32], index: 2, kind: input, shape index: {}]
  %s3 = inlined_call_operand.hbm [shape: f32[16,32], index: 3, kind: output, shape index: {}]
  %s4 = sld [smem:[#allocation0]]
  $region26: #{tpu_custom_call.1} parent=0
    _
  %s6 = ssub.s32 1, %s4
  %s7 = scalar_select 0, %s6, %s4
  $region1: #{tpu_custom_call.1} parent=0
    #allocation2 [shape = 'u8[8192]{0}', space=vmem, size = 0x2000, scoped, tag = 'input window, operand 0, single buffered']
    #allocation3 [shape = 's32[1]{0}', space=sflag, size = 0x4, scoped, tag = 'scoped memory for tpu_custom_call.1']
    #allocation4 [shape = 's32[1]{0}', space=sflag, size = 0x4, scoped, tag = 'scoped memory for tpu_custom_call.1']
    #allocation5 [shape = 'u8[8192]{0}', space=vmem, size = 0x2000, scoped, tag = 'output window, operand 0, single buffered']
    %8 = vsyncpa [#allocation3], 0
    %9 = vsyncpa [#allocation4], 0
    // Predicated region
    $region2: #{tpu_custom_call.1} parent=1 // pred_check
      _
    $region3: #{tpu_custom_call.1} parent=1 // pred_check_branch
      %11 = sbr.rel (0) target = $region5
    $region4: #{tpu_custom_call.1} parent=1 // pred_region
      %s13 = ssub.s32 256, 256
      %14 = vsyncadd [#allocation3], %s13
      %s15 = sshll.u32 [#allocation2], 4
      %s16 = int_to_ptr.vmem [resolvable:$true] %s15
      %21 = dma.hbm_to_vmem [thread:$0]  %s0, 256, %s16, [#allocation3], 128, 128, 8
    $region5: #{tpu_custom_call.1} parent=1 // pred_fallthru
      _
    // Predicated region
    $region6: #{tpu_custom_call.1} parent=1 // pred_check
      _
    $region7: #{tpu_custom_call.1} parent=1 // pred_check_branch
      %23 = sbr.rel (0) target = $region9
    $region8: #{tpu_custom_call.1} parent=1 // pred_region
      _
    $region9: #{tpu_custom_call.1} parent=1 // pred_fallthru
      _
    // Predicated region
    $region10: #{tpu_custom_call.1} parent=1 // pred_check
      _
    $region11: #{tpu_custom_call.1} parent=1 // pred_check_branch
      %25 = sbr.rel (0) target = $region13
    $region12: #{tpu_custom_call.1} parent=1 // pred_region
      _
    $region13: #{tpu_custom_call.1} parent=1 // pred_fallthru
      _
    // Predicated region
    $region14: #{tpu_custom_call.1} parent=1 // pred_check
      _
    $region15: #{tpu_custom_call.1} parent=1 // pred_check_branch
      %27 = sbr.rel (0) target = $region17
    $region16: #{tpu_custom_call.1} parent=1 // pred_region
      %28 = dma.done [#allocation3], 256
    $region17: #{tpu_custom_call.1} parent=1 // pred_fallthru
      _
    %v29 = vld [vmem:[#allocation2] sm:$0xff]
    %v30 = vld [vmem:[#allocation2 + $0x8] sm:$0xff]
    %vm31 = vcmask 261120
    %v32 = vsel %vm31, %v29, 0.0
    %33 = vadd.xlane.f32.xlu0 %v32
    %v34 = vpop.xlane.xlu0 %33
    %v35 = vsel %vm31, %v30, 0.0
    %36 = vadd.xlane.f32.xlu0 %v35
    %v37 = vpop.xlane.xlu0 %36
    %v38 = vrcp.pop 32.0
    %v39 = vmul.f32 %v34, %v38
    %v40 = vmul.f32 %v37, %v38
    %v41 = vsub.f32 %v29, %v39
    %v42 = vsub.f32 %v30, %v40
    %v43 = vmul.f32 %v41, %v41
    %v44 = vmul.f32 %v42, %v42
    %v45 = vsel %vm31, %v43, 0.0
    %46 = vadd.xlane.f32.xlu0 %v45
    %v47 = vpop.xlane.xlu0 %46
    %v48 = vsel %vm31, %v44, 0.0
    %49 = vadd.xlane.f32.xlu0 %v48
    %v50 = vpop.xlane.xlu0 %49
    %v51 = vmul.f32 %v47, %v38
    %v52 = vmul.f32 %v50, %v38
    %v53 = vadd.f32 %v51, 1e-05
    %v54 = vadd.f32 %v52, 1e-05
    %v55 = vrsqrt.pop %v53
    %v56 = vrsqrt.pop %v54
    %v57 = vmul.f32 %v41, %v55
    %v58 = vmul.f32 %v42, %v56
    %v59 = vld [vmem:[%s1] sm:$0x1]
    %v61 = vlaneseq
    %v62 = vshrl.u32 %v61, 7
    %v63 = vsub.s32 0, %v62
    %v64 = vrot.slane %v59, %v63
    %v66 = vmul.f32 %v57, %v64
    %v67 = vmul.f32 %v58, %v64
    %v68 = vld [vmem:[%s2] sm:$0x1]
    %v70 = vlaneseq
    %v71 = vshrl.u32 %v70, 7
    %v72 = vsub.s32 0, %v71
    %v73 = vrot.slane %v68, %v72
    %v75 = vadd.f32 %v66, %v73
    %v76 = vadd.f32 %v67, %v73
    %77 = vst.msk [vmem:[#allocation5] sm:$0xff] %vm31, %v75
    %78 = vst.msk [vmem:[#allocation5 + $0x8] sm:$0xff] %vm31, %v76
    // Predicated region
    $region18: #{tpu_custom_call.1} parent=1 // pred_check
      _
    $region19: #{tpu_custom_call.1} parent=1 // pred_check_branch
      %80 = sbr.rel (0) target = $region21
    $region20: #{tpu_custom_call.1} parent=1 // pred_region
      %s82 = ssub.s32 256, 256
      %83 = vsyncadd [#allocation4], %s82
      %s84 = sshll.u32 [#allocation5], 4
      %s85 = int_to_ptr.vmem [resolvable:$true] %s84
      %90 = dma.vmem_to_hbm [thread:$0]  %s85, 256, %s3, [#allocation4], 128, 128, 8
    $region21: #{tpu_custom_call.1} parent=1 // pred_fallthru
      _
    // Predicated region
    $region22: #{tpu_custom_call.1} parent=1 // pred_check
      _
    $region23: #{tpu_custom_call.1} parent=1 // pred_check_branch
      %92 = sbr.rel (0) target = $region25
    $region24: #{tpu_custom_call.1} parent=1 // pred_region
      %93 = dma.done [#allocation4], 256
    $region25: #{tpu_custom_call.1} parent=1 // pred_fallthru
      _
    %94 = vsyncpa [#allocation3], 1
    %95 = vsyncpa [#allocation4], 1

</llo_original>
